<compile_context>
chip_gen: v7x
topology: tpu7x:2x2x1
jax: 0.10.0
libtpu: 0.0.40
codegen_flags: <defaults>
</compile_context>

<pallas_src>
import jax
import jax.numpy as jnp
from jax import lax
from jax.experimental import pallas as pl
from jax.experimental.pallas import tpu as pltpu

LANE = 128


def _round_up(n, m):
    return (n + m - 1) // m * m


def _disc_kernel_vec_head(x_ref, w1_ref, b1_ref, w2b_ref, b2_ref, o_ref):
    """out_dim == 1 head: lane-dense (1, 1, tm) output per grid step."""
    # fc1 on the MXU: in-register bf16 cast of x (hides under the DMA), f32 acc.
    xb = x_ref[...].astype(jnp.bfloat16)
    h = jnp.dot(xb, w1_ref[...], preferred_element_type=jnp.float32)    # (tm, Hp)
    h = h + b1_ref[...]
    # LeakyReLU(0.1) in f32 on the VPU.
    h = jnp.where(h > 0, h, 0.1 * h)
    # fc2 (single output column): contract over the hidden axis with the batch
    # dim landing on lanes -> (8, tm); row 0 is the result.  Keeps the output
    # store lane-dense (unmasked vst) instead of a (tm, 1) masked store.
    yt = lax.dot_general(
        w2b_ref[...], h.astype(jnp.bfloat16),
        dimension_numbers=(((1,), (1,)), ((), ())),
        preferred_element_type=jnp.float32)                             # (8, tm)
    y = yt[0:1, :] + b2_ref[...]                                        # (1, tm)
    o_ref[...] = y[None].astype(o_ref.dtype)                            # (1,1,tm)


def _disc_kernel_mxu_head(x_ref, w1_ref, b1_ref, w2_ref, b2_ref, o_ref):
    """General head (out_dim > 1, output columns lane-padded to 128)."""
    xb = x_ref[...].astype(jnp.bfloat16)
    h = jnp.dot(xb, w1_ref[...], preferred_element_type=jnp.float32)
    h = h + b1_ref[...]
    h = jnp.where(h > 0, h, 0.1 * h)
    # bf16 second matmul with f32 accumulation (avoids multi-pass f32 MXU work).
    y = jnp.dot(h.astype(jnp.bfloat16), w2_ref[...],
                preferred_element_type=jnp.float32) + b2_ref[...]
    o_ref[...] = y.astype(o_ref.dtype)


def discriminator_forward(x, w1, b1, w2, b2, input_size, *, tm_target=1024):
    """y = leaky_relu(x.view(-1, input_size) @ w1 + b1, 0.1) @ w2 + b2.

    w1: (input_size, hidden), w2: (hidden, out_dim)  (transposed vs nn.Linear.weight).
    Matmul operands are quantized to bf16 in-kernel with f32 accumulation
    (intentional precision choice for discriminator logits).
    """
    x2d = x.reshape(-1, input_size)            # mirrors x.view(-1, input_size)
    batch = x2d.shape[0]
    hidden = w1.shape[1]
    out_dim = w2.shape[1]
    out_dtype = x2d.dtype

    # --- batch tiling ---------------------------------------------------------
    # Target >= 4 grid steps so the "parallel" batch axis can shard across both
    # TensorCores on v7x; tm is a multiple of 8 (f32 sublane granularity).
    tm = max(8, min(tm_target, _round_up(pl.cdiv(batch, 4), 8)))

    # Zero-pad hidden (and out_dim in the general head) to the 128-lane width;
    # padded lanes contribute exactly 0.
    hp = _round_up(hidden, LANE)
    op = 1 if out_dim == 1 else _round_up(out_dim, LANE)

    # --- VMEM budget guard ----------------------------------------------------
    # Keep the double-buffered x tile + resident weights + f32 intermediates
    # under v5e's 16 MiB scoped-VMEM default (also leaves headroom on v7x's
    # 64 MiB physical VMEM).  Only kicks in for large input_size / tm.
    def vmem_bytes(t):
        return (2 * t * input_size * x2d.dtype.itemsize   # pipelined x tiles
                + 2 * input_size * hp * 2                 # resident bf16 w1 (2 bufs)
                + 2 * hp * max(op, 8) * 2                 # resident bf16 w2
                + 3 * t * hp * 4                          # f32 h / MXU results
                + 2 * t * max(op, 1) * 4                  # output tiles
                + (1 << 16))                              # slack
    while tm > 16 and vmem_bytes(tm) > (12 << 20):
        tm = max(16, _round_up(tm // 2, 8))
    cparams = pltpu.CompilerParams(
        dimension_semantics=("parallel",),
        vmem_limit_bytes=(min(2 * vmem_bytes(tm), 48 << 20)
                          if vmem_bytes(tm) > (12 << 20) else None))

    num_tiles = pl.cdiv(batch, tm)
    grid = (num_tiles,)
    # x streamed in its original dtype; bf16 cast happens in-kernel.
    x_spec = pl.BlockSpec((tm, input_size), lambda i: (i, 0))
    const2 = lambda i: (0, 0)

    w1_p = jnp.zeros((input_size, hp), jnp.bfloat16).at[:, :hidden].set(
        w1.astype(jnp.bfloat16))
    b1_p = jnp.zeros((1, hp), jnp.float32).at[:, :hidden].set(
        b1.astype(jnp.float32).reshape(1, hidden))

    if out_dim == 1:
        # w2 row broadcast to 8 sublanes (tiny, resident) -> clean MXU operand.
        w2_b = jnp.zeros((8, hp), jnp.bfloat16).at[:, :hidden].set(
            jnp.broadcast_to(w2.astype(jnp.bfloat16).reshape(1, hidden),
                             (8, hidden)))
        b2_p = b2.astype(jnp.float32).reshape(1, 1)
        out = pl.pallas_call(
            _disc_kernel_vec_head,
            out_shape=jax.ShapeDtypeStruct((num_tiles, 1, tm), jnp.float32),
            grid=grid,
            in_specs=[x_spec,
                      pl.BlockSpec((input_size, hp), const2),
                      pl.BlockSpec((1, hp), const2),
                      pl.BlockSpec((8, hp), const2),
                      pl.BlockSpec((1, 1), const2)],
            out_specs=pl.BlockSpec((1, 1, tm), lambda i: (i, 0, 0)),
            compiler_params=cparams,
        )(x2d, w1_p, b1_p, w2_b, b2_p)
        # (num_tiles, 1, tm) -> (num_tiles*tm, 1); rows past `batch` come from
        # the partial last input block (garbage) and are sliced off here.
        return out.reshape(num_tiles * tm, 1)[:batch].astype(out_dtype)

    # General out_dim: lane-pad output columns (unmasked stores), slice outside.
    # TODO(synk): for small out_dim, a bf16 writeback would halve output traffic.
    w2_p = jnp.zeros((hp, op), jnp.bfloat16).at[:hidden, :out_dim].set(
        w2.astype(jnp.bfloat16))
    b2_p = jnp.zeros((1, op), jnp.float32).at[:, :out_dim].set(
        b2.astype(jnp.float32).reshape(1, out_dim))
    out = pl.pallas_call(
        _disc_kernel_mxu_head,
        out_shape=jax.ShapeDtypeStruct((batch, op), jnp.float32),
        grid=grid,
        in_specs=[x_spec,
                  pl.BlockSpec((input_size, hp), const2),
                  pl.BlockSpec((1, hp), const2),
                  pl.BlockSpec((hp, op), const2),
                  pl.BlockSpec((1, op), const2)],
        out_specs=pl.BlockSpec((tm, op), lambda i: (i, 0)),
        compiler_params=cparams,
    )(x2d, w1_p, b1_p, w2_p, b2_p)
    return out[:, :out_dim].astype(out_dtype)


def reference_forward(x, w1, b1, w2, b2, input_size):
    # Same math; applies the same bf16 quantization of the matmul operands that
    # the kernel uses (f32 accumulation / bias / LeakyReLU).
    x2d = x.reshape(-1, input_size).astype(jnp.float32)
    xq = x2d.astype(jnp.bfloat16).astype(jnp.float32)
    w1q = w1.astype(jnp.bfloat16).astype(jnp.float32)
    h = xq @ w1q + b1.astype(jnp.float32)
    h = jnp.where(h > 0, h, 0.1 * h)
    hq = h.astype(jnp.bfloat16).astype(jnp.float32)
    w2q = w2.astype(jnp.bfloat16).astype(jnp.float32)
    return hq @ w2q + b2.astype(jnp.float32)


if __name__ == "__main__":
    # Small shapes consistent with the module: x of shape (2, 4, 16) is viewed
    # as (-1, input_size) = (8, 16).
    input_size = 16
    hidden_dim = 32
    output_size = 1

    key = jax.random.PRNGKey(0)
    kx, kw1, kb1, kw2, kb2 = jax.random.split(key, 5)

    x = jax.random.normal(kx, (2, 4, input_size), dtype=jnp.float32)
    # Deterministic parameter init (uniform, like torch's default Linear init scale).
    lim1 = 1.0 / (input_size ** 0.5)
    lim2 = 1.0 / (hidden_dim ** 0.5)
    w1 = jax.random.uniform(kw1, (input_size, hidden_dim), jnp.float32, -lim1, lim1)
    b1 = jax.random.uniform(kb1, (hidden_dim,), jnp.float32, -lim1, lim1)
    w2 = jax.random.uniform(kw2, (hidden_dim, output_size), jnp.float32, -lim2, lim2)
    b2 = jax.random.uniform(kb2, (output_size,), jnp.float32, -lim2, lim2)

    out = discriminator_forward(x, w1, b1, w2, b2, input_size)
    out = jax.block_until_ready(out)

    ref = reference_forward(x, w1, b1, w2, b2, input_size)
    assert out.shape == (8, output_size), out.shape
    assert jnp.allclose(out, ref, atol=5e-3, rtol=5e-3), "mismatch vs reference"

    print("KERNEL_OK")
</pallas_src>

<mosaic_0001>
module attributes {stable_mosaic.version = 11 : i64} {
  func.func @_disc_kernel_vec_head(%arg0: i32, %arg1: memref<8x16xf32, #tpu.memory_space<vmem>>, %arg2: memref<16x128xbf16, #tpu.memory_space<vmem>>, %arg3: memref<1x128xf32, #tpu.memory_space<vmem>>, %arg4: memref<8x128xbf16, #tpu.memory_space<vmem>>, %arg5: memref<1x1xf32, #tpu.memory_space<vmem>>, %arg6: memref<1x1x8xf32, #tpu.memory_space<vmem>>) attributes {dimension_semantics = [#tpu.dimension_semantics<parallel>], iteration_bounds = array<i64: 1>, scalar_prefetch = 0 : i64, scratch_operands = 0 : i64, tpu.core_type = #tpu.core_type<tc>, window_params = [{transform_indices = @transform_0, window_bounds = array<i64: 8, 16>}, {pipeline_mode = #tpu.pipeline_mode<synchronous>, transform_indices = @transform_1, window_bounds = array<i64: 16, 128>}, {pipeline_mode = #tpu.pipeline_mode<synchronous>, transform_indices = @transform_2, window_bounds = array<i64: 1, 128>}, {pipeline_mode = #tpu.pipeline_mode<synchronous>, transform_indices = @transform_3, window_bounds = array<i64: 8, 128>}, {pipeline_mode = #tpu.pipeline_mode<synchronous>, transform_indices = @transform_4, window_bounds = array<i64: 1, 1>}, {transform_indices = @transform_5, window_bounds = array<i64: 1, 1, 8>}]} {
    %c0 = arith.constant 0 : index
    %c0_0 = arith.constant 0 : index
    %0 = vector.load %arg1[%c0, %c0_0] : memref<8x16xf32, #tpu.memory_space<vmem>>, vector<8x16xf32>
    %1 = arith.truncf %0 : vector<8x16xf32> to vector<8x16xbf16>
    %c0_1 = arith.constant 0 : index
    %c0_2 = arith.constant 0 : index
    %2 = vector.load %arg2[%c0_1, %c0_2] : memref<16x128xbf16, #tpu.memory_space<vmem>>, vector<16x128xbf16>
    %cst = arith.constant dense<0.000000e+00> : vector<8x128xf32>
    %3 = tpu.matmul %1, %2, %cst {dimension_numbers = #tpu.dot_dimension_numbers<[1], [0], [0], [1], [0, 0, 1, 1], [], []>} : vector<8x16xbf16>, vector<16x128xbf16>, vector<8x128xf32> -> vector<8x128xf32>
    %c0_3 = arith.constant 0 : index
    %c0_4 = arith.constant 0 : index
    %4 = vector.load %arg3[%c0_3, %c0_4] : memref<1x128xf32, #tpu.memory_space<vmem>>, vector<1x128xf32>
    %5 = vector.broadcast %4 : vector<1x128xf32> to vector<8x128xf32>
    %6 = arith.addf %3, %5 : vector<8x128xf32>
    %cst_5 = arith.constant 0.000000e+00 : f32
    %7 = vector.broadcast %cst_5 : f32 to vector<8x128xf32>
    %8 = arith.cmpf ogt, %6, %7 : vector<8x128xf32>
    %cst_6 = arith.constant 1.000000e-01 : f32
    %9 = vector.broadcast %cst_6 : f32 to vector<8x128xf32>
    %10 = arith.mulf %9, %6 : vector<8x128xf32>
    %11 = arith.select %8, %6, %10 : vector<8x128xi1>, vector<8x128xf32>
    %c0_7 = arith.constant 0 : index
    %c0_8 = arith.constant 0 : index
    %12 = vector.load %arg4[%c0_7, %c0_8] : memref<8x128xbf16, #tpu.memory_space<vmem>>, vector<8x128xbf16>
    %13 = arith.truncf %11 : vector<8x128xf32> to vector<8x128xbf16>
    %cst_9 = arith.constant dense<0.000000e+00> : vector<8x8xf32>
    %14 = tpu.matmul %12, %13, %cst_9 {dimension_numbers = #tpu.dot_dimension_numbers<[1], [1], [0], [0], [0, 0, 1, 0], [], []>} : vector<8x128xbf16>, vector<8x128xbf16>, vector<8x8xf32> -> vector<8x8xf32>
    %15 = vector.extract_strided_slice %14 {offsets = [0, 0], sizes = [1, 8], strides = [1, 1]} : vector<8x8xf32> to vector<1x8xf32>
    %c0_10 = arith.constant 0 : index
    %c0_11 = arith.constant 0 : index
    %16 = vector.load %arg5[%c0_10, %c0_11] : memref<1x1xf32, #tpu.memory_space<vmem>>, vector<1x1xf32>
    %17 = vector.broadcast %16 : vector<1x1xf32> to vector<1x8xf32>
    %18 = arith.addf %15, %17 : vector<1x8xf32>
    %19 = vector.shape_cast %18 : vector<1x8xf32> to vector<1x1x8xf32>
    %c0_12 = arith.constant 0 : index
    %c0_13 = arith.constant 0 : index
    %c0_14 = arith.constant 0 : index
    %20 = vector.load %arg6[%c0_12, %c0_13, %c0_14] : memref<1x1x8xf32, #tpu.memory_space<vmem>>, vector<1x1x8xf32>
    tpu.vector_store %arg6[%c0_12, %c0_13, %c0_14], %19 {strides = array<i32>} : memref<1x1x8xf32, #tpu.memory_space<vmem>>, vector<1x1x8xf32>,
    return
  }
  func.func @transform_0(%arg0: i32) -> (i32, i32) {
    %c0_i32 = arith.constant 0 : i32
    %c0_i32_0 = arith.constant 0 : i32
    return %arg0, %c0_i32 : i32, i32
  }
  func.func @transform_1(%arg0: i32) -> (i32, i32) {
    %c0_i32 = arith.constant 0 : i32
    %c0_i32_0 = arith.constant 0 : i32
    %c0_i32_1 = arith.constant 0 : i32
    return %c0_i32, %c0_i32_0 : i32, i32
  }
  func.func @transform_2(%arg0: i32) -> (i32, i32) {
    %c0_i32 = arith.constant 0 : i32
    %c0_i32_0 = arith.constant 0 : i32
    %c0_i32_1 = arith.constant 0 : i32
    return %c0_i32, %c0_i32_0 : i32, i32
  }
  func.func @transform_3(%arg0: i32) -> (i32, i32) {
    %c0_i32 = arith.constant 0 : i32
    %c0_i32_0 = arith.constant 0 : i32
    %c0_i32_1 = arith.constant 0 : i32
    return %c0_i32, %c0_i32_0 : i32, i32
  }
  func.func @transform_4(%arg0: i32) -> (i32, i32) {
    %c0_i32 = arith.constant 0 : i32
    %c0_i32_0 = arith.constant 0 : i32
    %c0_i32_1 = arith.constant 0 : i32
    return %c0_i32, %c0_i32_0 : i32, i32
  }
  func.func @transform_5(%arg0: i32) -> (i32, i32, i32) {
    %c0_i32 = arith.constant 0 : i32
    %c0_i32_0 = arith.constant 0 : i32
    %c0_i32_1 = arith.constant 0 : i32
    return %arg0, %c0_i32, %c0_i32_0 : i32, i32, i32
  }
}

</mosaic_0001>

<llo_original>
// kernel: tpu_custom_call.1
$region0: #{tpu_custom_call.1}
  #allocation0 [shape = 'u32[]', space=smem, size = 0x4, offset = 0x4, fixed_abs, tag = 'smem constant byte address 0x4 - core index']
  #allocation1 [shape = 'u32[144,128]{1,0:T(1,128)}', space=vmem, size = 0x12000, scoped, tag = 'internal scratch']
  #allocation2 [shape = 'f32[1,1]{1,0:T(1,128)S(1)}', space=vmem, size = 0x200, scoped, tag = 'scoped memory for tpu_custom_call.1']
  %s0 = inlined_call_operand.hbm [shape: f32[8,16], index: 0, kind: input, shape index: {}]
  %s1 = inlined_call_operand.hbm [shape: bf16[16,128], index: 1, kind: input, shape index: {}]
  %s2 = inlined_call_operand.vmem [shape: f32[1,128], index: 2, kind: input, shape index: {}]
  %s3 = inlined_call_operand.vmem [shape: bf16[8,128], index: 3, kind: input, shape index: {}]
  %s4 = inlined_call_operand.<no memory space> [shape: f32[1,1], index: 4, kind: input, shape index: {}]
  %s5 = inlined_call_operand.hbm [shape: f32[1,1,8], index: 5, kind: output, shape index: {}]
  %s6 = sld [smem:[#allocation0]]
  $region38: #{tpu_custom_call.1} parent=0
    _
  %s8 = ssub.s32 1, %s6
  %s9 = scalar_select 0, %s8, %s6
  %v10 = vstv %s4
  %11 = vst [vmem:[#allocation2] sm:$0x1] %v10
  $region1: #{tpu_custom_call.1} parent=0
    #allocation3 [shape = 'u8[4096]{0}', space=vmem, size = 0x1000, scoped, tag = 'input window, operand 0, single buffered']
    #allocation4 [shape = 's32[1]{0}', space=sflag, size = 0x4, scoped, tag = 'scoped memory for tpu_custom_call.1']
    #allocation5 [shape = 's32[1]{0}', space=sflag, size = 0x4, scoped, tag = 'scoped memory for tpu_custom_call.1']
    #allocation6 [shape = 'u8[4096]{0}', space=vmem, size = 0x1000, scoped, tag = 'input window, operand 1, single buffered']
    #allocation7 [shape = 's32[1]{0}', space=sflag, size = 0x4, scoped, tag = 'scoped memory for tpu_custom_call.1']
    #allocation8 [shape = 'u8[512]{0}', space=vmem, size = 0x400, scoped, tag = 'output window, operand 0, single buffered']
    %12 = vsyncpa [#allocation4], 0
    %13 = vsyncpa [#allocation7], 0
    %14 = vsyncpa [#allocation5], 0
    // Predicated region
    $region2: #{tpu_custom_call.1} parent=1 // pred_check
      _
    $region3: #{tpu_custom_call.1} parent=1 // pred_check_branch
      %16 = sbr.rel (0) target = $region5
    $region4: #{tpu_custom_call.1} parent=1 // pred_region
      %s18 = ssub.s32 128, 128
      %19 = vsyncadd [#allocation4], %s18
      %s21 = sshll.u32 [#allocation3], 4
      %s22 = int_to_ptr.vmem [resolvable:$true] %s21
      %24 = dma.hbm_to_vmem [thread:$0]  %s0, 128, %s22, [#allocation4]
    $region5: #{tpu_custom_call.1} parent=1 // pred_fallthru
      _
    // Predicated region
    $region6: #{tpu_custom_call.1} parent=1 // pred_check
      _
    $region7: #{tpu_custom_call.1} parent=1 // pred_check_branch
      %26 = sbr.rel (0) target = $region9
    $region8: #{tpu_custom_call.1} parent=1 // pred_region
      %s28 = ssub.s32 128, 128
      %29 = vsyncadd [#allocation7], %s28
      %s30 = sshll.u32 [#allocation6], 4
      %s31 = int_to_ptr.vmem [resolvable:$true] %s30
      %36 = dma.hbm_to_vmem [thread:$0]  %s1, 128, %s31, [#allocation7], 64, 64, 4
    $region9: #{tpu_custom_call.1} parent=1 // pred_fallthru
      _
    // Predicated region
    $region10: #{tpu_custom_call.1} parent=1 // pred_check
      _
    $region11: #{tpu_custom_call.1} parent=1 // pred_check_branch
      %38 = sbr.rel (0) target = $region13
    $region12: #{tpu_custom_call.1} parent=1 // pred_region
      _
    $region13: #{tpu_custom_call.1} parent=1 // pred_fallthru
      _
    // Predicated region
    $region14: #{tpu_custom_call.1} parent=1 // pred_check
      _
    $region15: #{tpu_custom_call.1} parent=1 // pred_check_branch
      %40 = sbr.rel (0) target = $region17
    $region16: #{tpu_custom_call.1} parent=1 // pred_region
      _
    $region17: #{tpu_custom_call.1} parent=1 // pred_fallthru
      _
    // Predicated region
    $region18: #{tpu_custom_call.1} parent=1 // pred_check
      _
    $region19: #{tpu_custom_call.1} parent=1 // pred_check_branch
      %42 = sbr.rel (0) target = $region21
    $region20: #{tpu_custom_call.1} parent=1 // pred_region
      _
    $region21: #{tpu_custom_call.1} parent=1 // pred_fallthru
      _
    // Predicated region
    $region22: #{tpu_custom_call.1} parent=1 // pred_check
      _
    $region23: #{tpu_custom_call.1} parent=1 // pred_check_branch
      %44 = sbr.rel (0) target = $region25
    $region24: #{tpu_custom_call.1} parent=1 // pred_region
      %45 = dma.done [#allocation4], 128
    $region25: #{tpu_custom_call.1} parent=1 // pred_fallthru
      _
    // Predicated region
    $region26: #{tpu_custom_call.1} parent=1 // pred_check
      _
    $region27: #{tpu_custom_call.1} parent=1 // pred_check_branch
      %47 = sbr.rel (0) target = $region29
    $region28: #{tpu_custom_call.1} parent=1 // pred_region
      %48 = dma.done [#allocation7], 128
    $region29: #{tpu_custom_call.1} parent=1 // pred_fallthru
      _
    %v50 = vld [vmem:[#allocation3] sm:$0xff]
    %v51 = vpack.c.bf16 %v50, %v50
    %v52 = vld [vmem:[#allocation6] sm:$0xf]
    %v53 = vld [vmem:[#allocation6 + $0x4] sm:$0xf]
    %v54 = vld [vmem:[%s2] sm:$0x1]
    %v56 = vlaneseq
    %v57 = vshrl.u32 %v56, 7
    %v58 = vsub.s32 0, %v57
    %v59 = vrot.slane %v54, %v58
    %v63 = vunpack.c.l.b16 %v52
    %v64 = vunpack.c.l.b16 %v53
    %v65 = vpack.c.b16 %v64, %v63
    %vm67 = vcmask 130048
    %v69 = vsel %vm67, %v51, 0
    %71 = vmatprep.subr.bf16.mxu0 0
    %72 = vmatpush1.bf16.msra.mxu0 %v65
    %73 = vmatprep.subr.bf16.mxu0 0
    %74 = vmatpush1.bf16.msra.mxu0 0
    %75 = vmatprep.subr.bf16.mxu0 0
    %76 = vmatpush1.bf16.msra.mxu0 0
    %77 = vmatprep.subr.bf16.mxu0 0
    %78 = vmatpush1.bf16.msra.mxu0 0
    %79 = vmatprep.subr.bf16.mxu0 0
    %80 = vmatpush1.bf16.msra.mxu0 0
    %81 = vmatprep.subr.bf16.mxu0 0
    %82 = vmatpush1.bf16.msra.mxu0 0
    %83 = vmatprep.subr.bf16.mxu0 0
    %84 = vmatpush1.bf16.msra.mxu0 0
    %85 = vmatprep.subr.bf16.mxu0 0
    %86 = vmatpush1.bf16.msra.mxu0 0
    %87 = vmatprep.subr.bf16.mxu0 0
    %88 = vmatpush1.bf16.msra.mxu0 0
    %89 = vmatprep.subr.bf16.mxu0 0
    %90 = vmatpush1.bf16.msra.mxu0 0
    %91 = vmatprep.subr.bf16.mxu0 0
    %92 = vmatpush1.bf16.msra.mxu0 0
    %93 = vmatprep.subr.bf16.mxu0 0
    %94 = vmatpush1.bf16.msra.mxu0 0
    %95 = vmatprep.subr.bf16.mxu0 0
    %96 = vmatpush1.bf16.msra.mxu0 0
    %97 = vmatprep.subr.bf16.mxu0 0
    %98 = vmatpush1.bf16.msra.mxu0 0
    %99 = vmatprep.subr.bf16.mxu0 0
    %100 = vmatpush1.bf16.msra.mxu0 0
    %101 = vmatprep.subr.bf16.mxu0 0
    %102 = vmatpush1.bf16.msra.mxu0 0
    %103 = vmatprep.mubr.bf16.mxu0 0
    %104 = vmatmul.mubr.bf16.gmra.mrb[0].mxu0 %v69
    %v105 = vpop.f32.mrb[0].mxu0
    %v106 = vadd.f32 %v59, %v105
    %v107 = vpop.f32.mrb[0].mxu0
    %v108 = vpop.f32.mrb[0].mxu0
    %v109 = vpop.f32.mrb[0].mxu0
    %110 = vdwg.mxu0
    %vm111 = vcmp.gt.f32.partialorder %v106, 0.0
    %v112 = vmul.f32 %v106, 0.1
    %v113 = vsel %vm111, %v106, %v112
    %v114 = vld [vmem:[%s3] sm:$0xf]
    %v115 = vpack.c.bf16 %v113, %v113
    %116 = vmatprep.subr.bf16.mxu0 0
    %117 = vmatpush1.bf16.xpose.msra.mxu0 %v115
    %118 = vmatprep.subr.bf16.mxu0 0
    %119 = vmatpush1.bf16.xpose.msra.mxu0 0
    %120 = vmatprep.subr.bf16.mxu0 0
    %121 = vmatpush1.bf16.xpose.msra.mxu0 0
    %122 = vmatprep.subr.bf16.mxu0 0
    %123 = vmatpush1.bf16.xpose.msra.mxu0 0
    %124 = vmatprep.subr.bf16.mxu0 0
    %125 = vmatpush1.bf16.xpose.msra.mxu0 0
    %126 = vmatprep.subr.bf16.mxu0 0
    %127 = vmatpush1.bf16.xpose.msra.mxu0 0
    %128 = vmatprep.subr.bf16.mxu0 0
    %129 = vmatpush1.bf16.xpose.msra.mxu0 0
    %130 = vmatprep.subr.bf16.mxu0 0
    %131 = vmatpush1.bf16.xpose.msra.mxu0 0
    %132 = vmatprep.subr.bf16.mxu0 0
    %133 = vmatpush1.bf16.xpose.msra.mxu0 0
    %134 = vmatprep.subr.bf16.mxu0 0
    %135 = vmatpush1.bf16.xpose.msra.mxu0 0
    %136 = vmatprep.subr.bf16.mxu0 0
    %137 = vmatpush1.bf16.xpose.msra.mxu0 0
    %138 = vmatprep.subr.bf16.mxu0 0
    %139 = vmatpush1.bf16.xpose.msra.mxu0 0
    %140 = vmatprep.subr.bf16.mxu0 0
    %141 = vmatpush1.bf16.xpose.msra.mxu0 0
    %142 = vmatprep.subr.bf16.mxu0 0
    %143 = vmatpush1.bf16.xpose.msra.mxu0 0
    %144 = vmatprep.subr.bf16.mxu0 0
    %145 = vmatpush1.bf16.xpose.msra.mxu0 0
    %146 = vmatprep.subr.bf16.mxu0 0
    %147 = vmatpush1.bf16.xpose.msra.mxu0 0
    %148 = vmatprep.mubr.bf16.mxu0 0
    %149 = vmatmul.mubr.bf16.gmra.mrb[0].mxu0 %v114
    %v150 = vpop.f32.mrb[0].mxu0
    %v151 = vadd.f32 0.0, %v150
    %v152 = vpop.f32.mrb[0].mxu0
    %v153 = vpop.f32.mrb[0].mxu0
    %v154 = vpop.f32.mrb[0].mxu0
    %155 = vdwg.mxu0
    %v156 = vld [vmem:[#allocation2] sm:$0x1]
    %158 = vset.pattern.permute.xlu0 0
    %159 = vperm.xlu0 %158, %v156
    %v160 = vpop.permute.xlu0 %159
    %v162 = vlaneseq
    %v163 = vshrl.u32 %v162, 7
    %v164 = vsub.s32 0, %v163
    %v165 = vrot.slane %v160, %v164
    %v166 = vadd.f32 %v151, %v165
    %vm167 = vcmask 57344
    %168 = vst.msk [vmem:[#allocation8] sm:$0x1] %vm167, %v166
    // Predicated region
    $region30: #{tpu_custom_call.1} parent=1 // pred_check
      _
    $region31: #{tpu_custom_call.1} parent=1 // pred_check_branch
      %170 = sbr.rel (0) target = $region33
    $region32: #{tpu_custom_call.1} parent=1 // pred_region
      %s172 = ssub.s32 16, 16
      %173 = vsyncadd [#allocation5], %s172
      %s175 = sshll.u32 [#allocation8], 4
      %s176 = int_to_ptr.vmem [resolvable:$true] %s175
      %178 = dma.vmem_to_hbm [thread:$0]  %s176, 16, %s5, [#allocation5]
    $region33: #{tpu_custom_call.1} parent=1 // pred_fallthru
      _
    // Predicated region
    $region34: #{tpu_custom_call.1} parent=1 // pred_check
      _
    $region35: #{tpu_custom_call.1} parent=1 // pred_check_branch
      %180 = sbr.rel (0) target = $region37
    $region36: #{tpu_custom_call.1} parent=1 // pred_region
      %181 = dma.done [#allocation5], 16
    $region37: #{tpu_custom_call.1} parent=1 // pred_fallthru
      _
    %182 = vsyncpa [#allocation4], 1
    %183 = vsyncpa [#allocation7], 1
    %184 = vsyncpa [#allocation5], 1

</llo_original>
